<compile_context>
chip_gen: v5e
topology: v5e:2x2
jax: 0.10.0
libtpu: 0.0.40
codegen_flags: <defaults>
</compile_context>

<pallas_src>
import math

import jax
import jax.numpy as jnp
import numpy as np
from jax.experimental import pallas as pl
from jax.experimental.pallas import tpu as pltpu

KSIZE = 3
SIGMA = 2.0


def gaussian_weights_1d(kernel_size: int = KSIZE, sigma: float = SIGMA) -> np.ndarray:
    """1D factor of get_gaussian_kernel(): the 2D kernel is exactly outer(g, g)."""
    mean = (kernel_size - 1) / 2.0
    var = sigma ** 2.0
    g = np.array([math.exp(-((i - mean) ** 2) / (2.0 * var)) for i in range(kernel_size)],
                 dtype=np.float64)
    return (g / g.sum()).astype(np.float32)


def gaussian_weights_2d(kernel_size: int = KSIZE, sigma: float = SIGMA) -> np.ndarray:
    """Exactly mirrors get_gaussian_kernel()'s 2D weight construction (reference only)."""
    mean = (kernel_size - 1) / 2.0
    var = sigma ** 2.0
    w = np.zeros((kernel_size, kernel_size), dtype=np.float64)
    for i in range(kernel_size):          # y_grid[i, j] = i
        for j in range(kernel_size):      # x_grid[i, j] = j
            w[i, j] = (1.0 / (2.0 * math.pi * var)) * math.exp(
                -(((j - mean) ** 2) + ((i - mean) ** 2)) / (2.0 * var))
    return (w / w.sum()).astype(np.float32)


_GAUSS1D = gaussian_weights_1d()
_GW = gaussian_weights_2d()
_W_EDGE = float(_GAUSS1D[0])          # == _GAUSS1D[2] (symmetric kernel)
_W_MID = float(_GAUSS1D[1])


# -----------------------------------------------------------------------------
# Generation-conditional VMEM budgets (v5e/v6e: 128 MiB VMEM, v7x: 64 MiB).
# -----------------------------------------------------------------------------
def _tpu_budgets():
    vmem = 0
    try:
        info = pltpu.get_tpu_info()
        for attr in ("vmem_capacity_bytes", "vmem_bytes", "vmem_size_bytes"):
            v = getattr(info, attr, None)
            if v:
                vmem = int(v)
                break
    except Exception:
        vmem = 0
    if vmem >= 100 * 1024 * 1024:                 # v5e / v6e (128 MiB physical VMEM)
        return 64 * 1024 * 1024, 4 * 1024 * 1024
    return 40 * 1024 * 1024, 2 * 1024 * 1024      # v7x (64 MiB) or unknown -> conservative


_VMEM_LIMIT, _BLOCK_BUDGET = _tpu_budgets()
_LANE_CAP = 2048                                  # keeps the (8, L) loss partials small


def _mosaic(dims):
    return pltpu.CompilerParams(dimension_semantics=dims, vmem_limit_bytes=_VMEM_LIMIT)


# -----------------------------------------------------------------------------
# (8,128)-safe tiling helpers
# -----------------------------------------------------------------------------
def _largest_divisor(total: int, cap: int) -> int:
    cap = max(1, min(total, cap))
    for d in range(cap, 0, -1):
        if total % d == 0:
            return d
    return 1


def _pick_lane_width(hw: int):
    """Largest multiple of 128 dividing hw (capped), or None if none exists."""
    cap = min(hw, _LANE_CAP)
    m = (cap // 128) * 128
    while m >= 128:
        if hw % m == 0:
            return m
        m -= 128
    return None


def _pick_row_tile(rows: int, lanes: int) -> int:
    """Divisor of rows that is a multiple of 8 (or the full extent) within budget."""
    budget_rows = max(1, _BLOCK_BUDGET // (lanes * 4))
    if rows <= budget_rows:
        return rows
    t = (min(rows, budget_rows) // 8) * 8
    while t >= 8:
        if rows % t == 0:
            return t
        t -= 8
    return rows          # full extent: always BlockSpec-valid (rare pathological shapes)


def _image_layout(h: int, w: int):
    """Lane-dense (rows, lanes, row_tile) layout for an HxW plane."""
    hw = h * w
    lanes = _pick_lane_width(hw)
    if lanes is None:                 # no 128-multiple divisor: keep full (H, W) plane
        rows, lanes = h, w            # last dim = full extent -> spec-valid
    else:
        rows = hw // lanes
    return rows, lanes, _pick_row_tile(rows, lanes)


# -----------------------------------------------------------------------------
# In-kernel separable 3x3 gaussian with replicate padding
# -----------------------------------------------------------------------------
def _neighbors(x, axis):
    """(prev, next) of x along `axis` with replicate (edge-clamp) padding."""
    ax = axis % x.ndim
    n = x.shape[ax]
    if n == 1:
        return x, x
    lane_ok = x.shape[-1] % 128 == 0
    sub_ok = x.shape[-2] % 8 == 0
    if lane_ok and sub_ok:
        # natively tiled block: shift on the XLU via pltpu.roll + 1-line fix-up
        idx = jax.lax.broadcasted_iota(jnp.int32, x.shape, ax)
        prv = jnp.where(idx == 0, x, pltpu.roll(x, shift=1, axis=ax))
        nxt = jnp.where(idx == n - 1, x, pltpu.roll(x, shift=n - 1, axis=ax))
        return prv, nxt

    # robust fallback for non lane/sublane-aligned dims (e.g. tiny test planes)
    def take(sl):
        index = [slice(None)] * x.ndim
        index[ax] = sl
        return x[tuple(index)]

    prv = jnp.concatenate([take(slice(0, 1)), take(slice(0, n - 1))], axis=ax)
    nxt = jnp.concatenate([take(slice(1, n)), take(slice(n - 1, n))], axis=ax)
    return prv, nxt


def _blur_plane(x):
    """Separable 3x3 gaussian, replicate pad, on the last two axes. Symmetric
    weights -> 4 multiplies per element (g0 == g2)."""
    xl, xr = _neighbors(x, -1)
    hp = _W_MID * x + _W_EDGE * (xl + xr)
    up, dn = _neighbors(hp, -2)
    return _W_MID * hp + _W_EDGE * (up + dn)


def _partial_rows(d):
    """(tr, L) f32 -> (8, L) per-lane partial sums using only sublane-group
    elementwise vreg adds (no per-step scalar tree reduce)."""
    tr, lns = d.shape
    pad = (-tr) % 8
    if pad:
        d = jnp.concatenate([d, jnp.zeros((pad, lns), d.dtype)], axis=0)
    return d.reshape(-1, 8, lns).sum(axis=0)


# -----------------------------------------------------------------------------
# Kernel 1: standalone gaussian blur (self.filter equivalent)
# -----------------------------------------------------------------------------
def _blur_kernel(x_ref, o_ref):
    o_ref[...] = _blur_plane(x_ref[...].astype(jnp.float32)).astype(o_ref.dtype)


def gaussian_blur(x_nchw: jax.Array) -> jax.Array:
    """Equivalent of self.filter(x): depthwise 3x3 gaussian conv, replicate pad."""
    n, c, h, w = x_nchw.shape
    p = n * c
    planes = x_nchw.reshape(p, h, w)
    bp = _largest_divisor(p, max(1, _BLOCK_BUDGET // (h * w * 4)))
    out = pl.pallas_call(
        _blur_kernel,
        out_shape=jax.ShapeDtypeStruct((p, h, w), x_nchw.dtype),
        grid=(p // bp,),
        in_specs=[pl.BlockSpec((bp, h, w), lambda i: (i, 0, 0))],
        out_specs=pl.BlockSpec((bp, h, w), lambda i: (i, 0, 0)),
        compiler_params=_mosaic(("parallel",)),
    )(planes)
    return out.reshape(n, c, h, w)


# -----------------------------------------------------------------------------
# Kernels 2/3: masked composition & line overlay (lane-dense elementwise)
# Grid is (N, rows/tr, C) with the channel axis innermost so the mask block is
# fetched once per (n, row-tile) and reused across C.
# -----------------------------------------------------------------------------
def _compose_kernel(f_ref, b_ref, m_ref, o_ref):
    m = m_ref[...].astype(jnp.float32)
    f = f_ref[...].astype(jnp.float32)
    b = b_ref[...].astype(jnp.float32)
    o_ref[...] = (f * m + b * (1.0 - m)).astype(o_ref.dtype)


def _line_overlay_kernel(b_ref, l_ref, o_ref):
    l = l_ref[...].astype(jnp.float32)
    b = b_ref[...].astype(jnp.float32)
    o_ref[...] = (b * (1.0 - l) + l).astype(o_ref.dtype)


def _elementwise_layout(n, c, h, w):
    rows, lanes, tr = _image_layout(h, w)
    rt = rows // tr
    img_spec = pl.BlockSpec((None, None, tr, lanes), lambda i, r, j: (i, j, r, 0))
    msk_spec = pl.BlockSpec((None, None, tr, lanes), lambda i, r, j: (i, 0, r, 0))
    grid = (n, rt, c)
    return rows, lanes, grid, img_spec, msk_spec


def compose(fake, base, mask):
    """fake*mask + base*(1-mask). mask is (N,1,H,W) and never broadcast in HBM."""
    n, c, h, w = fake.shape
    rows, lanes, grid, img_spec, msk_spec = _elementwise_layout(n, c, h, w)
    out = pl.pallas_call(
        _compose_kernel,
        out_shape=jax.ShapeDtypeStruct((n, c, rows, lanes), fake.dtype),
        grid=grid,
        in_specs=[img_spec, img_spec, msk_spec],
        out_specs=img_spec,
        compiler_params=_mosaic(("parallel", "parallel", "parallel")),
    )(fake.reshape(n, c, rows, lanes), base.reshape(n, c, rows, lanes),
      mask.reshape(n, 1, rows, lanes))
    return out.reshape(n, c, h, w)


def line_overlay(base, line):
    """base*(1-line) + 1*line (visline; the ones tensor is never materialized)."""
    n, c, h, w = base.shape
    rows, lanes, grid, img_spec, msk_spec = _elementwise_layout(n, c, h, w)
    out = pl.pallas_call(
        _line_overlay_kernel,
        out_shape=jax.ShapeDtypeStruct((n, c, rows, lanes), base.dtype),
        grid=grid,
        in_specs=[img_spec, msk_spec],
        out_specs=img_spec,
        compiler_params=_mosaic(("parallel", "parallel", "parallel")),
    )(base.reshape(n, c, rows, lanes), line.reshape(n, 1, rows, lanes))
    return out.reshape(n, c, h, w)


# -----------------------------------------------------------------------------
# Kernel 4: fused compose + L1(composed, real) + L1(fake, real)
# -----------------------------------------------------------------------------
def _compose_l1_kernel(f_ref, b_ref, m_ref, t_ref, o_ref, pc_ref, pf_ref):
    r = pl.program_id(1)
    j = pl.program_id(2)
    m = m_ref[...].astype(jnp.float32)
    f = f_ref[...].astype(jnp.float32)
    t = t_ref[...].astype(jnp.float32)
    comp = f * m + b_ref[...].astype(jnp.float32) * (1.0 - m)
    o_ref[...] = comp.astype(o_ref.dtype)

    @pl.when(jnp.logical_and(r == 0, j == 0))
    def _():
        pc_ref[...] = jnp.zeros_like(pc_ref)
        pf_ref[...] = jnp.zeros_like(pf_ref)

    # per-lane partial accumulation in the resident (8, L) output blocks
    pc_ref[...] += _partial_rows(jnp.abs(comp - t))
    pf_ref[...] += _partial_rows(jnp.abs(f - t))


def compose_l1(fake, base, mask, target):
    """Fused: composed = fake*mask + base*(1-mask), mean|composed-target| and
    mean|fake-target| — fake/target are read from HBM exactly once."""
    n, c, h, w = fake.shape
    rows, lanes, grid, img_spec, msk_spec = _elementwise_layout(n, c, h, w)
    part_spec = pl.BlockSpec((None, 8, lanes), lambda i, r, j: (i, 0, 0))
    composed, pc, pf = pl.pallas_call(
        _compose_l1_kernel,
        out_shape=(jax.ShapeDtypeStruct((n, c, rows, lanes), fake.dtype),
                   jax.ShapeDtypeStruct((n, 8, lanes), jnp.float32),
                   jax.ShapeDtypeStruct((n, 8, lanes), jnp.float32)),
        grid=grid,
        in_specs=[img_spec, img_spec, msk_spec, img_spec],
        out_specs=(img_spec, part_spec, part_spec),
        compiler_params=_mosaic(("parallel", "arbitrary", "arbitrary")),
    )(fake.reshape(n, c, rows, lanes), base.reshape(n, c, rows, lanes),
      mask.reshape(n, 1, rows, lanes), target.reshape(n, c, rows, lanes))
    denom = float(n * c * h * w)
    return composed.reshape(n, c, h, w), jnp.sum(pc) / denom, jnp.sum(pf) / denom


# -----------------------------------------------------------------------------
# Kernel 5: fused blur(real) + blur(fake) + blur(base) + compose + L1_blur
# Per-(batch, channel) plane tiling keeps VMEM small (fits v7x's 64 MiB);
# blur(base) and blur(real) never leave VMEM before the L1 reduction.
# -----------------------------------------------------------------------------
def _blur_fused_kernel(f_ref, b_ref, m_ref, t_ref, rb_ref, fb_ref, p_ref):
    j = pl.program_id(1)
    f = f_ref[...].astype(jnp.float32)
    t = t_ref[...].astype(jnp.float32)
    m = m_ref[...].astype(jnp.float32)
    rb = _blur_plane(t)                                   # real_blur (output)
    fb = _blur_plane(f)                                   # fake_blur (output)
    bb = _blur_plane(b_ref[...].astype(jnp.float32))      # blur(base): VMEM only
    rb_ref[...] = rb.astype(rb_ref.dtype)
    fb_ref[...] = fb.astype(fb_ref.dtype)
    comp = f * m + bb * (1.0 - m)

    @pl.when(j == 0)
    def _():
        p_ref[...] = jnp.zeros_like(p_ref)

    p_ref[...] += _partial_rows(jnp.abs(comp - rb))


def blur_compose_l1_fused(fake, base, mask, real):
    """Returns (blur(real), blur(fake), mean| fake*mask + blur(base)*(1-mask) - blur(real) |)."""
    # TODO(synk): for very tall images additionally tile H with a 2-row halo;
    #             per-(N,C) plane tiling is sufficient for typical resolutions.
    n, c, h, w = fake.shape
    img_spec = pl.BlockSpec((None, None, h, w), lambda i, j: (i, j, 0, 0))
    msk_spec = pl.BlockSpec((None, None, h, w), lambda i, j: (i, 0, 0, 0))
    part_spec = pl.BlockSpec((None, 8, w), lambda i, j: (i, 0, 0))
    real_blur, fake_blur, partial = pl.pallas_call(
        _blur_fused_kernel,
        out_shape=(jax.ShapeDtypeStruct((n, c, h, w), real.dtype),
                   jax.ShapeDtypeStruct((n, c, h, w), fake.dtype),
                   jax.ShapeDtypeStruct((n, 8, w), jnp.float32)),
        grid=(n, c),
        in_specs=[img_spec, img_spec, msk_spec, img_spec],
        out_specs=(img_spec, img_spec, part_spec),
        compiler_params=_mosaic(("parallel", "arbitrary")),
    )(fake, base, mask, real)
    return real_blur, fake_blur, jnp.sum(partial) / float(fake.size)


# -----------------------------------------------------------------------------
# Forward-pass glue mirroring EditLine2Model (the parts that are defined).
# -----------------------------------------------------------------------------
def editline2_inference(inputs, fake_image, mask):
    """mode == 'inference': composed = fake * mask + inputs * (1 - mask)."""
    composed = compose(fake_image, inputs, mask)
    return composed, mask


def editline2_generator_images(inputs, input_inpaint, fake_image, real_image,
                               mask_inpaint, line_inpaint):
    """mode == 'generator' visual outputs + the implementable pieces of
    g_image_loss (opt.filt_maskim=True so the gaussian filter path runs)."""
    visline = line_overlay(input_inpaint, line_inpaint)
    # fused: composed image + L1(composed, real) + L1(fake, real) in one pass
    composed, l1c, l1f = compose_l1(fake_image, input_inpaint, mask_inpaint, real_image)
    # fused: blur(real), blur(fake), blur(input)->compose->L1 vs blurred real
    real_blur, fake_blur, l1_blur = blur_compose_l1_fused(
        fake_image, input_inpaint, mask_inpaint, real_image)

    losses = {"L1c": l1c, "L1f": l1f, "L1_blur": l1_blur}
    generated = {
        "visline": visline,
        "composed": composed,
        "real_blur": real_blur,
        "fake_blur": fake_blur,
        "gt": real_image,
    }
    return losses, generated


# -----------------------------------------------------------------------------
# Pure-JAX references for correctness sanity checks.
# -----------------------------------------------------------------------------
def _blur_ref(x):
    n, c, h, w = x.shape
    p = x.reshape(n * c, h, w)
    xp = jnp.pad(p, ((0, 0), (1, 1), (1, 1)), mode="edge")
    acc = jnp.zeros_like(p)
    for dy in range(3):
        for dx in range(3):
            acc = acc + _GW[dy, dx] * xp[:, dy:dy + h, dx:dx + w]
    return acc.reshape(n, c, h, w)


if __name__ == "__main__":
    key = jax.random.PRNGKey(0)
    k1, k2, k3, k4, k5 = jax.random.split(key, 5)

    N, C, H, W = 2, 3, 16, 16   # RGB images, matching channels=3 gaussian filter
    image = jax.random.normal(k1, (N, C, H, W), jnp.float32)          # data['image']
    real_image = jax.random.normal(k2, (N, C, H, W), jnp.float32)     # data['gt']
    # TODO(synk): these would be netG / netM outputs; replaced by test tensors.
    fake_image = jax.random.normal(k3, (N, C, H, W), jnp.float32)
    mask = jax.random.uniform(k4, (N, 1, H, W), jnp.float32)
    line = (jax.random.uniform(k5, (N, 1, H, W), jnp.float32) > 0.8).astype(jnp.float32)

    # inference mode
    composed_inf, out_mask = editline2_inference(image, fake_image, mask)
    # generator-mode image math + losses
    losses, generated = editline2_generator_images(
        image, image, fake_image, real_image, mask, line)
    # standalone self.filter equivalent
    image_blur = gaussian_blur(image)

    jax.block_until_ready(composed_inf)
    jax.block_until_ready(losses["L1c"])
    jax.block_until_ready(generated["real_blur"])
    jax.block_until_ready(image_blur)

    # sanity checks vs pure-JAX references
    ref_comp = fake_image * mask + image * (1 - mask)
    ref_real_blur = _blur_ref(real_image)
    ref_fake_blur = _blur_ref(fake_image)
    ref_in_blur = _blur_ref(image)
    ref_blur_com = fake_image * mask + ref_in_blur * (1 - mask)
    ref_visline = image * (1 - line) + line

    np.testing.assert_allclose(np.asarray(composed_inf), np.asarray(ref_comp),
                               rtol=1e-5, atol=1e-5)
    np.testing.assert_allclose(np.asarray(generated["composed"]), np.asarray(ref_comp),
                               rtol=1e-5, atol=1e-5)
    np.testing.assert_allclose(np.asarray(generated["visline"]), np.asarray(ref_visline),
                               rtol=1e-5, atol=1e-5)
    np.testing.assert_allclose(np.asarray(generated["real_blur"]),
                               np.asarray(ref_real_blur), rtol=1e-5, atol=1e-5)
    np.testing.assert_allclose(np.asarray(generated["fake_blur"]),
                               np.asarray(ref_fake_blur), rtol=1e-5, atol=1e-5)
    np.testing.assert_allclose(np.asarray(image_blur), np.asarray(ref_in_blur),
                               rtol=1e-5, atol=1e-5)
    np.testing.assert_allclose(float(losses["L1c"]),
                               float(jnp.mean(jnp.abs(ref_comp - real_image))),
                               rtol=1e-5, atol=1e-6)
    np.testing.assert_allclose(float(losses["L1f"]),
                               float(jnp.mean(jnp.abs(fake_image - real_image))),
                               rtol=1e-5, atol=1e-6)
    np.testing.assert_allclose(float(losses["L1_blur"]),
                               float(jnp.mean(jnp.abs(ref_blur_com - ref_real_blur))),
                               rtol=1e-5, atol=1e-6)

    print("KERNEL_OK")
</pallas_src>

<mosaic_0001>
module attributes {stable_mosaic.version = 11 : i64} {
  func.func @_compose_kernel(%arg0: i32, %arg1: i32, %arg2: i32, %arg3: memref<1x1x1x256xf32, #tpu.memory_space<vmem>>, %arg4: memref<1x1x1x256xf32, #tpu.memory_space<vmem>>, %arg5: memref<1x1x1x256xf32, #tpu.memory_space<vmem>>, %arg6: memref<1x1x1x256xf32, #tpu.memory_space<vmem>>) attributes {dimension_semantics = [#tpu.dimension_semantics<parallel>, #tpu.dimension_semantics<parallel>, #tpu.dimension_semantics<parallel>], iteration_bounds = array<i64: 2, 1, 3>, scalar_prefetch = 0 : i64, scratch_operands = 0 : i64, tpu.core_type = #tpu.core_type<tc>, window_params = [{transform_indices = @transform_0, window_bounds = array<i64: 1, 1, 1, 256>}, {transform_indices = @transform_1, window_bounds = array<i64: 1, 1, 1, 256>}, {transform_indices = @transform_2, window_bounds = array<i64: 1, 1, 1, 256>}, {transform_indices = @transform_3, window_bounds = array<i64: 1, 1, 1, 256>}]} {
    %c0 = arith.constant 0 : index
    %c0_0 = arith.constant 0 : index
    %c0_1 = arith.constant 0 : index
    %c0_2 = arith.constant 0 : index
    %0 = vector.load %arg5[%c0, %c0_0, %c0_1, %c0_2] : memref<1x1x1x256xf32, #tpu.memory_space<vmem>>, vector<1x1x1x256xf32>
    %1 = vector.shape_cast %0 : vector<1x1x1x256xf32> to vector<1x256xf32>
    %c0_3 = arith.constant 0 : index
    %c0_4 = arith.constant 0 : index
    %c0_5 = arith.constant 0 : index
    %c0_6 = arith.constant 0 : index
    %2 = vector.load %arg3[%c0_3, %c0_4, %c0_5, %c0_6] : memref<1x1x1x256xf32, #tpu.memory_space<vmem>>, vector<1x1x1x256xf32>
    %3 = vector.shape_cast %2 : vector<1x1x1x256xf32> to vector<1x256xf32>
    %c0_7 = arith.constant 0 : index
    %c0_8 = arith.constant 0 : index
    %c0_9 = arith.constant 0 : index
    %c0_10 = arith.constant 0 : index
    %4 = vector.load %arg4[%c0_7, %c0_8, %c0_9, %c0_10] : memref<1x1x1x256xf32, #tpu.memory_space<vmem>>, vector<1x1x1x256xf32>
    %5 = vector.shape_cast %4 : vector<1x1x1x256xf32> to vector<1x256xf32>
    %6 = arith.mulf %3, %1 : vector<1x256xf32>
    %cst = arith.constant 1.000000e+00 : f32
    %7 = vector.broadcast %cst : f32 to vector<1x256xf32>
    %8 = arith.subf %7, %1 : vector<1x256xf32>
    %9 = arith.mulf %5, %8 : vector<1x256xf32>
    %10 = arith.addf %6, %9 : vector<1x256xf32>
    %c0_11 = arith.constant 0 : index
    %c0_12 = arith.constant 0 : index
    %c0_13 = arith.constant 0 : index
    %c0_14 = arith.constant 0 : index
    %11 = vector.load %arg6[%c0_11, %c0_12, %c0_13, %c0_14] : memref<1x1x1x256xf32, #tpu.memory_space<vmem>>, vector<1x1x1x256xf32>
    %12 = vector.shape_cast %11 : vector<1x1x1x256xf32> to vector<1x256xf32>
    %13 = vector.shape_cast %10 : vector<1x256xf32> to vector<1x1x1x256xf32>
    tpu.vector_store %arg6[%c0_11, %c0_12, %c0_13, %c0_14], %13 {strides = array<i32>} : memref<1x1x1x256xf32, #tpu.memory_space<vmem>>, vector<1x1x1x256xf32>,
    return
  }
  func.func @transform_0(%arg0: i32, %arg1: i32, %arg2: i32) -> (i32, i32, i32, i32) {
    %c0_i32 = arith.constant 0 : i32
    %c0_i32_0 = arith.constant 0 : i32
    return %arg0, %arg2, %arg1, %c0_i32 : i32, i32, i32, i32
  }
  func.func @transform_1(%arg0: i32, %arg1: i32, %arg2: i32) -> (i32, i32, i32, i32) {
    %c0_i32 = arith.constant 0 : i32
    %c0_i32_0 = arith.constant 0 : i32
    return %arg0, %arg2, %arg1, %c0_i32 : i32, i32, i32, i32
  }
  func.func @transform_2(%arg0: i32, %arg1: i32, %arg2: i32) -> (i32, i32, i32, i32) {
    %c0_i32 = arith.constant 0 : i32
    %c0_i32_0 = arith.constant 0 : i32
    %c0_i32_1 = arith.constant 0 : i32
    return %arg0, %c0_i32, %arg1, %c0_i32_0 : i32, i32, i32, i32
  }
  func.func @transform_3(%arg0: i32, %arg1: i32, %arg2: i32) -> (i32, i32, i32, i32) {
    %c0_i32 = arith.constant 0 : i32
    %c0_i32_0 = arith.constant 0 : i32
    return %arg0, %arg2, %arg1, %c0_i32 : i32, i32, i32, i32
  }
}

</mosaic_0001>

<llo_original>
// kernel: tpu_custom_call.1
$region0: #{tpu_custom_call.1}
  #allocation0 [shape = 'u32[]', space=smem, size = 0x4, offset = 0x4, fixed_abs, tag = 'smem constant byte address 0x4 - core index']
  #allocation1 [shape = 'u32[72,128]{1,0:T(1,128)}', space=vmem, size = 0x9000, scoped, tag = 'internal scratch']
  %s0 = inlined_call_operand.hbm [shape: f32[2,3,1,256], index: 0, kind: input, shape index: {}]
  %s1 = inlined_call_operand.hbm [shape: f32[2,3,1,256], index: 1, kind: input, shape index: {}]
  %s2 = inlined_call_operand.hbm [shape: f32[2,1,1,256], index: 2, kind: input, shape index: {}]
  %s3 = inlined_call_operand.hbm [shape: f32[2,3,1,256], index: 3, kind: output, shape index: {}]
  %s4 = sld [smem:[#allocation0]]
  $region57: #{tpu_custom_call.1} parent=0
    _
  %s6 = ssub.s32 1, %s4
  %s7 = scalar_select 0, %s6, %s4
  $region1: #{tpu_custom_call.1} parent=0
    #allocation2 [shape = 'u8[2048]{0}', space=vmem, size = 0x800, scoped, tag = 'input window, operand 0']
    #allocation3 [shape = 's32[2]{0}', space=sflag, size = 0x8, scoped, tag = 'scoped memory for tpu_custom_call.1']
    #allocation4 [shape = 's32[2]{0}', space=sflag, size = 0x8, scoped, tag = 'scoped memory for tpu_custom_call.1']
    #allocation5 [shape = 'u8[2048]{0}', space=vmem, size = 0x800, scoped, tag = 'input window, operand 1']
    #allocation6 [shape = 's32[2]{0}', space=sflag, size = 0x8, scoped, tag = 'scoped memory for tpu_custom_call.1']
    #allocation7 [shape = 'u8[2048]{0}', space=vmem, size = 0x800, scoped, tag = 'input window, operand 2']
    #allocation8 [shape = 'u8[2048]{0}', space=vmem, size = 0x800, scoped, tag = 'output window, operand 0']
    %8 = vsyncpa [#allocation3], 0
    %s9 = scalar_lea.sflag [#allocation3], 1
    %10 = vsyncpa %s9, 0
    %11 = vsyncpa [#allocation6], 0
    %s12 = scalar_lea.sflag [#allocation6], 1
    %13 = vsyncpa %s12, 0
    %14 = vsyncpa [#allocation4], 0
    %s15 = scalar_lea.sflag [#allocation4], 1
    %16 = vsyncpa %s15, 0
    loop: start=0, step=1, limit=8
    $region2: #{tpu_custom_call.1} parent=1 // loop_pre_header
      _
    $region3: #{tpu_custom_call.1} parent=1 // loop_header
      %s18 = sphi 0, %s22
      %p19 = scmp.ge.s32.totalorder %s18, 8
      %s25 = sphi 0, %s44
      %s26 = sphi 0, %s40
      %s27 = sphi 0, %s36
      %s28 = sphi 0, %s25
      %s29 = sphi 0, %s26
      %s30 = sphi 0, %s27
      %s31 = sphi 0, %s28
      %s32 = sphi 0, %s29
      %s33 = sphi 0, %s30
      %s51 = sphi 0, %s53
      %s54 = sphi 0, %s51
      %s55 = sphi 0, %s54
      %s71 = sphi 0, %s55
      %s81 = sphi 0, %s83
      %s84 = sphi 0, %s81
      %s85 = sphi 0, %s84
      %s101 = sphi 0, %s85
      %s109 = sphi 0, %s111
      %s112 = sphi 0, %s109
      %s113 = sphi 0, %s112
      %s129 = sphi 0, %s113
      %s139 = sphi 0, %s141
      %s142 = sphi 0, %s139
      %s143 = sphi 0, %s142
      %s159 = sphi 0, %s143
    $region4: #{tpu_custom_call.1} parent=1 // loop_header_branch
      %21 = sbr.rel (%p19) target = $region8
    $region5: #{tpu_custom_call.1} parent=1 // loop_body
      %s23 = ssub.s32 %s18, 1
      %s24 = ssub.s32 %s18, 2
      %s34 = sadd.s32 1, %s27
      %p35 = scmp.ge.s32.totalorder %s34, 3
      %s36 = scalar_select %p35, 0, %s34
      %s37 = sadd.s32 1, %s26
      %s38 = scalar_select %p35, %s37, %s26
      %p39 = scmp.ge.s32.totalorder %s38, 1
      %s40 = scalar_select %p39, 0, %s38
      %s41 = sadd.s32 1, %s25
      %s42 = scalar_select %p39, %s41, %s25
      %p43 = scmp.ge.s32.totalorder %s42, 2
      %s44 = scalar_select %p43, 0, %s42
      %s45 = ssub.s32 %s25, %s44
      %s46 = ssub.s32 %s27, %s36
      %s47 = sor.u32 %s45, %s46
      %s48 = ssub.s32 %s26, %s40
      %s49 = sor.u32 %s47, %s48
      %p50 = scmp.eq.s32.totalorder %s49, 0
      %s52 = sadd.s32 %s51, 1
      %s53 = scalar_select %p50, %s51, %s52
      %p56 = pneg %p50
      %p57 = scmp.eq.s32.totalorder %s18, 5
      %p58 = por %p56, %p57
      %p59 = scmp.ne.s32.totalorder %s51, %s54
      %p60 = scmp.eq.s32.totalorder %s18, 0
      %p61 = por %p59, %p60
      %p62 = scmp.ne.s32.totalorder %s51, %s54
      %p63 = scmp.eq.s32.totalorder %s23, 5
      %p64 = por %p62, %p63
      %p65 = scmp.ne.s32.totalorder %s54, %s55
      %p66 = scmp.eq.s32.totalorder %s23, 0
      %p67 = por %p65, %p66
      %p68 = scmp.ne.s32.totalorder %s54, %s55
      %p69 = scmp.eq.s32.totalorder %s24, 5
      %p70 = por %p68, %p69
      %p72 = scmp.ne.s32.totalorder %s55, %s71
      %p73 = scmp.eq.s32.totalorder %s24, 0
      %p74 = por %p72, %p73
      %s75 = ssub.s32 %s25, %s44
      %s76 = ssub.s32 %s27, %s36
      %s77 = sor.u32 %s75, %s76
      %s78 = ssub.s32 %s26, %s40
      %s79 = sor.u32 %s77, %s78
      %p80 = scmp.eq.s32.totalorder %s79, 0
      %s82 = sadd.s32 %s81, 1
      %s83 = scalar_select %p80, %s81, %s82
      %p86 = pneg %p80
      %p87 = scmp.eq.s32.totalorder %s18, 5
      %p88 = por %p86, %p87
      %p89 = scmp.ne.s32.totalorder %s81, %s84
      %p90 = scmp.eq.s32.totalorder %s18, 0
      %p91 = por %p89, %p90
      %p92 = scmp.ne.s32.totalorder %s81, %s84
      %p93 = scmp.eq.s32.totalorder %s23, 5
      %p94 = por %p92, %p93
      %p95 = scmp.ne.s32.totalorder %s84, %s85
      %p96 = scmp.eq.s32.totalorder %s23, 0
      %p97 = por %p95, %p96
      %p98 = scmp.ne.s32.totalorder %s84, %s85
      %p99 = scmp.eq.s32.totalorder %s24, 5
      %p100 = por %p98, %p99
      %p102 = scmp.ne.s32.totalorder %s85, %s101
      %p103 = scmp.eq.s32.totalorder %s24, 0
      %p104 = por %p102, %p103
      %s105 = ssub.s32 %s25, %s44
      %s106 = ssub.s32 %s26, %s40
      %s107 = sor.u32 %s105, %s106
      %p108 = scmp.eq.s32.totalorder %s107, 0
      %s110 = sadd.s32 %s109, 1
      %s111 = scalar_select %p108, %s109, %s110
      %p114 = pneg %p108
      %p115 = scmp.eq.s32.totalorder %s18, 5
      %p116 = por %p114, %p115
      %p117 = scmp.ne.s32.totalorder %s109, %s112
      %p118 = scmp.eq.s32.totalorder %s18, 0
      %p119 = por %p117, %p118
      %p120 = scmp.ne.s32.totalorder %s109, %s112
      %p121 = scmp.eq.s32.totalorder %s23, 5
      %p122 = por %p120, %p121
      %p123 = scmp.ne.s32.totalorder %s112, %s113
      %p124 = scmp.eq.s32.totalorder %s23, 0
      %p125 = por %p123, %p124
      %p126 = scmp.ne.s32.totalorder %s112, %s113
      %p127 = scmp.eq.s32.totalorder %s24, 5
      %p128 = por %p126, %p127
      %p130 = scmp.ne.s32.totalorder %s113, %s129
      %p131 = scmp.eq.s32.totalorder %s24, 0
      %p132 = por %p130, %p131
      %s133 = ssub.s32 %s25, %s44
      %s134 = ssub.s32 %s27, %s36
      %s135 = sor.u32 %s133, %s134
      %s136 = ssub.s32 %s26, %s40
      %s137 = sor.u32 %s135, %s136
      %p138 = scmp.eq.s32.totalorder %s137, 0
      %s140 = sadd.s32 %s139, 1
      %s141 = scalar_select %p138, %s139, %s140
      %p144 = pneg %p138
      %p145 = scmp.eq.s32.totalorder %s18, 5
      %p146 = por %p144, %p145
      %p147 = scmp.ne.s32.totalorder %s139, %s142
      %p148 = scmp.eq.s32.totalorder %s18, 0
      %p149 = por %p147, %p148
      %p150 = scmp.ne.s32.totalorder %s139, %s142
      %p151 = scmp.eq.s32.totalorder %s23, 5
      %p152 = por %p150, %p151
      %p153 = scmp.ne.s32.totalorder %s142, %s143
      %p154 = scmp.eq.s32.totalorder %s23, 0
      %p155 = por %p153, %p154
      %p156 = scmp.ne.s32.totalorder %s142, %s143
      %p157 = scmp.eq.s32.totalorder %s24, 5
      %p158 = por %p156, %p157
      %p160 = scmp.ne.s32.totalorder %s143, %s159
      %p161 = scmp.eq.s32.totalorder %s24, 0
      %p162 = por %p160, %p161
      %p163 = scmp.le.s32.totalorder 1, %s18
      %p164 = scmp.lt.s32.totalorder %s18, 7
      %p165 = pnand %p163, %p164
      %p166 = pneg %p165
      // Predicated region
      $region9: #{tpu_custom_call.1} parent=5 // pred_check
        _
      $region10: #{tpu_custom_call.1} parent=5 // pred_check_branch
        %168 = sbr.rel (%p165) target = $region12
      $region11: #{tpu_custom_call.1} parent=5 // pred_region
        %s169 = ssub.s32 %s18, 1
      $region12: #{tpu_custom_call.1} parent=5 // pred_fallthru
        _
      %p170 = scmp.lt.s32.totalorder %s18, 6
      // Predicated region
      $region13: #{tpu_custom_call.1} parent=5 // pred_check
        %p171 = pneg %p170
      $region14: #{tpu_custom_call.1} parent=5 // pred_check_branch
        %173 = sbr.rel (%p171) target = $region16
      $region15: #{tpu_custom_call.1} parent=5 // pred_region
        // Predicated region
        $region17: #{tpu_custom_call.1} parent=15 // pred_check
          %p174 = pneg %p61
        $region18: #{tpu_custom_call.1} parent=15 // pred_check_branch
          %176 = sbr.rel (%p174) target = $region20
        $region19: #{tpu_custom_call.1} parent=15 // pred_region
          %s177 = sand.u32 %s51, 1
          %s178 = scalar_lea.sflag [#allocation3], %s177
          %s179 = sand.u32 %s51, 1
          %s180 = smul.addr %s179, 2
          %s181 = scalar_lea.vmem [#allocation2], %s180
          %183 = vsyncadd %s178, 0
          %s184 = smul.addr %s26, 2
          %s185 = smul.addr %s27, 2
          %s186 = sadd.s32 %s184, %s185
          %s187 = smul.addr %s25, 6
          %s188 = sadd.s32 %s186, %s187
          %s189 = scalar_lea.hbm %s0, %s188
          %s191 = sshll.u32 %s189, 4
          %s192 = int_to_ptr.hbm [resolvable:$true] %s191
          %s193 = sshll.u32 %s181, 4
          %s194 = int_to_ptr.vmem [resolvable:$true] %s193
          %196 = dma.hbm_to_vmem [thread:$0]  %s192, 32, %s194, %s178
        $region20: #{tpu_custom_call.1} parent=15 // pred_fallthru
          _
        // Predicated region
        $region21: #{tpu_custom_call.1} parent=15 // pred_check
          %p197 = pneg %p91
        $region22: #{tpu_custom_call.1} parent=15 // pred_check_branch
          %199 = sbr.rel (%p197) target = $region24
        $region23: #{tpu_custom_call.1} parent=15 // pred_region
          %s200 = sand.u32 %s18, 1
          %s201 = scalar_lea.sflag [#allocation6], %s200
          %s202 = sand.u32 %s81, 1
          %s203 = smul.addr %s202, 2
          %s204 = scalar_lea.vmem [#allocation5], %s203
          %206 = vsyncadd %s201, 0
          %s207 = smul.addr %s26, 2
          %s208 = smul.addr %s27, 2
          %s209 = sadd.s32 %s207, %s208
          %s210 = smul.addr %s25, 6
          %s211 = sadd.s32 %s209, %s210
          %s212 = scalar_lea.hbm %s1, %s211
          %s214 = sshll.u32 %s212, 4
          %s215 = int_to_ptr.hbm [resolvable:$true] %s214
          %s216 = sshll.u32 %s204, 4
          %s217 = int_to_ptr.vmem [resolvable:$true] %s216
          %219 = dma.hbm_to_vmem [thread:$0]  %s215, 32, %s217, %s201
        $region24: #{tpu_custom_call.1} parent=15 // pred_fallthru
          _
        // Predicated region
        $region25: #{tpu_custom_call.1} parent=15 // pred_check
          %p220 = pneg %p119
        $region26: #{tpu_custom_call.1} parent=15 // pred_check_branch
          %222 = sbr.rel (%p220) target = $region28
        $region27: #{tpu_custom_call.1} parent=15 // pred_region
          %s223 = sand.u32 %s18, 1
          %s224 = scalar_lea.sflag [#allocation6], %s223
          %s225 = sand.u32 %s109, 1
          %s226 = smul.addr %s225, 2
          %s227 = scalar_lea.vmem [#allocation7], %s226
          %229 = vsyncadd %s224, 0
          %s230 = smul.addr %s26, 2
          %s231 = smul.addr %s25, 2
          %s232 = sadd.s32 %s230, %s231
          %s233 = scalar_lea.hbm %s2, %s232
          %s235 = sshll.u32 %s233, 4
          %s236 = int_to_ptr.hbm [resolvable:$true] %s235
          %s237 = sshll.u32 %s227, 4
          %s238 = int_to_ptr.vmem [resolvable:$true] %s237
          %240 = dma.hbm_to_vmem [thread:$0]  %s236, 32, %s238, %s224
        $region28: #{tpu_custom_call.1} parent=15 // pred_fallthru
          _
      $region16: #{tpu_custom_call.1} parent=5 // pred_fallthru
        _
      %p241 = scmp.le.s32.totalorder 1, %s18
      %p242 = scmp.lt.s32.totalorder %s18, 7
      %p243 = pnand %p241, %p242
      %p244 = pneg %p243
      // Predicated region
      $region29: #{tpu_custom_call.1} parent=5 // pred_check
        _
      $region30: #{tpu_custom_call.1} parent=5 // pred_check_branch
        %246 = sbr.rel (%p243) target = $region32
      $region31: #{tpu_custom_call.1} parent=5 // pred_region
        %s247 = ssub.s32 %s18, 1
        %s248 = sand.u32 %s54, 1
        %s249 = scalar_lea.sflag [#allocation3], %s248
        %s250 = sand.u32 %s54, 1
        %s251 = smul.addr %s250, 2
        %s252 = scalar_lea.vmem [#allocation2], %s251
        // Predicated region
        $region33: #{tpu_custom_call.1} parent=31 // pred_check
          %p253 = pneg %p67
        $region34: #{tpu_custom_call.1} parent=31 // pred_check_branch
          %255 = sbr.rel (%p253) target = $region36
        $region35: #{tpu_custom_call.1} parent=31 // pred_region
          %257 = dma.done %s249, 32
        $region36: #{tpu_custom_call.1} parent=31 // pred_fallthru
          _
        %s258 = sand.u32 %s23, 1
        %s259 = scalar_lea.sflag [#allocation6], %s258
        %s260 = sand.u32 %s84, 1
        %s261 = smul.addr %s260, 2
        %s262 = scalar_lea.vmem [#allocation5], %s261
        // Predicated region
        $region37: #{tpu_custom_call.1} parent=31 // pred_check
          %p263 = pneg %p97
        $region38: #{tpu_custom_call.1} parent=31 // pred_check_branch
          %265 = sbr.rel (%p263) target = $region40
        $region39: #{tpu_custom_call.1} parent=31 // pred_region
          %267 = dma.done %s259, 32
        $region40: #{tpu_custom_call.1} parent=31 // pred_fallthru
          _
        %s268 = sand.u32 %s23, 1
        %s269 = scalar_lea.sflag [#allocation6], %s268
        %s270 = sand.u32 %s112, 1
        %s271 = smul.addr %s270, 2
        %s272 = scalar_lea.vmem [#allocation7], %s271
        // Predicated region
        $region41: #{tpu_custom_call.1} parent=31 // pred_check
          %p273 = pneg %p125
        $region42: #{tpu_custom_call.1} parent=31 // pred_check_branch
          %275 = sbr.rel (%p273) target = $region44
        $region43: #{tpu_custom_call.1} parent=31 // pred_region
          %277 = dma.done %s269, 32
        $region44: #{tpu_custom_call.1} parent=31 // pred_fallthru
          _
        %s278 = sand.u32 %s54, 1
        %s279 = scalar_lea.sflag [#allocation3], %s278
        %s280 = sand.u32 %s54, 1
        %s281 = smul.addr %s280, 2
        %s282 = scalar_lea.vmem [#allocation2], %s281
        %p283 = pneg %p67
        %p284 = pneg %p64
        %s285 = sand.u32 %s23, 1
        %s286 = scalar_lea.sflag [#allocation6], %s285
        %s287 = sand.u32 %s84, 1
        %s288 = smul.addr %s287, 2
        %s289 = scalar_lea.vmem [#allocation5], %s288
        %p290 = pneg %p97
        %p291 = pneg %p94
        %s292 = sand.u32 %s23, 1
        %s293 = scalar_lea.sflag [#allocation6], %s292
        %s294 = sand.u32 %s112, 1
        %s295 = smul.addr %s294, 2
        %s296 = scalar_lea.vmem [#allocation7], %s295
        %p297 = pneg %p125
        %p298 = pneg %p122
        %p299 = pneg %p155
        %p300 = pneg %p152
        %s301 = sand.u32 %s142, 1
        %s302 = scalar_lea.sflag [#allocation4], %s301
        %s303 = sand.u32 %s142, 1
        %s304 = smul.addr %s303, 2
        %s305 = scalar_lea.vmem [#allocation8], %s304
        %v306 = vld [vmem:[%s272] sm:$0x3]
        %v307 = vld [vmem:[%s252] sm:$0x3]
        %v308 = vld [vmem:[%s262] sm:$0x3]
        %v309 = vmul.f32 %v307, %v306
        %v310 = vsub.f32 1.0, %v306
        %v311 = vmul.f32 %v308, %v310
        %v312 = vadd.f32 %v309, %v311
        %v313 = vlaneseq
        %vm314 = vcmp.ge.s32.totalorder %v313, 0
        %vm315 = vcmp.lt.s32.totalorder %v313, 256
        %vm316 = vmand %vm314, %vm315
        %317 = vst.msk [vmem:[%s305] sm:$0x3] %vm316, %v312
        %s318 = sand.u32 %s142, 1
        %s319 = scalar_lea.sflag [#allocation4], %s318
        %s320 = sand.u32 %s142, 1
        %s321 = smul.addr %s320, 2
        %s322 = scalar_lea.vmem [#allocation8], %s321
        // Predicated region
        $region45: #{tpu_custom_call.1} parent=31 // pred_check
          %p323 = pneg %p152
        $region46: #{tpu_custom_call.1} parent=31 // pred_check_branch
          %325 = sbr.rel (%p323) target = $region48
        $region47: #{tpu_custom_call.1} parent=31 // pred_region
          %327 = vsyncadd %s319, 0
          %s328 = smul.addr %s29, 2
          %s329 = smul.addr %s30, 2
          %s330 = sadd.s32 %s328, %s329
          %s331 = smul.addr %s28, 6
          %s332 = sadd.s32 %s330, %s331
          %s333 = scalar_lea.hbm %s3, %s332
          %s335 = sshll.u32 %s322, 4
          %s336 = int_to_ptr.vmem [resolvable:$true] %s335
          %s337 = sshll.u32 %s333, 4
          %s338 = int_to_ptr.hbm [resolvable:$true] %s337
          %340 = dma.vmem_to_hbm [thread:$0]  %s336, 32, %s338, %s319
        $region48: #{tpu_custom_call.1} parent=31 // pred_fallthru
          _
      $region32: #{tpu_custom_call.1} parent=5 // pred_fallthru
        _
      %p341 = scmp.le.s32.totalorder 2, %s18
      // Predicated region
      $region49: #{tpu_custom_call.1} parent=5 // pred_check
        %p342 = pneg %p341
      $region50: #{tpu_custom_call.1} parent=5 // pred_check_branch
        %344 = sbr.rel (%p342) target = $region52
      $region51: #{tpu_custom_call.1} parent=5 // pred_region
        %s345 = ssub.s32 %s18, 2
        // Predicated region
        $region53: #{tpu_custom_call.1} parent=51 // pred_check
          %p346 = pneg %p158
        $region54: #{tpu_custom_call.1} parent=51 // pred_check_branch
          %348 = sbr.rel (%p346) target = $region56
        $region55: #{tpu_custom_call.1} parent=51 // pred_region
          %s349 = sand.u32 %s143, 1
          %s350 = scalar_lea.sflag [#allocation4], %s349
          %s351 = sand.u32 %s143, 1
          %s352 = smul.addr %s351, 2
          %s353 = scalar_lea.vmem [#allocation8], %s352
          %355 = dma.done %s350, 32
        $region56: #{tpu_custom_call.1} parent=51 // pred_fallthru
          _
      $region52: #{tpu_custom_call.1} parent=5 // pred_fallthru
        _
    $region6: #{tpu_custom_call.1} parent=1 // loop_footer
      %s22 = sadd.s32 1, %s18
    $region7: #{tpu_custom_call.1} parent=1 // loop_footer_branch
      %17 = sbr.rel target = $region3
    $region8: #{tpu_custom_call.1} parent=1 // loop_exit
      _
    %356 = vsyncpa [#allocation3], 1
    %s357 = scalar_lea.sflag [#allocation3], 1
    %358 = vsyncpa %s357, 1
    %359 = vsyncpa [#allocation6], 1
    %s360 = scalar_lea.sflag [#allocation6], 1
    %361 = vsyncpa %s360, 1
    %362 = vsyncpa [#allocation4], 1
    %s363 = scalar_lea.sflag [#allocation4], 1
    %364 = vsyncpa %s363, 1

</llo_original>
